<compile_context>
chip_gen: v6e
topology: v6e:2x2x1
jax: 0.10.0
libtpu: 0.0.40
codegen_flags: <defaults>
</compile_context>

<pallas_src>
import jax
import jax.numpy as jnp
from jax import lax
from jax.experimental import pallas as pl
from jax.experimental.pallas import tpu as pltpu
import numpy as np

_EPS = 1e-5   # BatchNorm1d default eps
_LANE = 128


def _round_up(x: int, m: int) -> int:
    return (x + m - 1) // m * m


def _make_kernel(num_layers: int, n_real: int, n_pad: int):
    inv_n = np.float32(1.0 / n_real)

    def kernel(h_ref, adj_ref, gamma_ref, beta_ref, w_ref, b_ref, out_ref, h_scr):
        # h_ref   : [Np, Hp] f32 padded node features (padded rows/cols zero)
        # adj_ref : [Np, Np] bf16 dense adjacency (dst, src), small int counts
        # gamma/beta : [L, 1, Hp] f32 batch-norm affine params (lane-padded)
        # w_ref   : [Hp, Op] bf16, b_ref : [1, Op] f32  (linear_prediction)
        # h_scr   : [Np, Hp] f32 VMEM scratch carrying h across layers
        # Row mask: 1 for real nodes, 0 for padded rows (keeps padded rows inert
        # and excludes them from the batch-norm statistics).
        row_ids = lax.broadcasted_iota(jnp.int32, (n_pad, 1), 0)
        mask = (row_ids < n_real).astype(jnp.float32)

        h_scr[...] = h_ref[...]
        for l in range(num_layers):  # static unroll; num_layers is small
            h = h_scr[...]
            # ACConv: sum-aggregation over in-neighbours on the MXU
            # (bf16 inputs, f32 accumulation), identity combine h + aggr, ReLU.
            aggr = jnp.dot(adj_ref[...], h.astype(jnp.bfloat16),
                           preferred_element_type=jnp.float32)
            h = jnp.maximum(h + aggr, 0.0)
            # BatchNorm1d over the (real) node axis, training-mode batch stats,
            # two-pass variance for numerical robustness.
            mean = jnp.sum(h, axis=0, keepdims=True) * inv_n
            d = (h - mean) * mask
            var = jnp.sum(d * d, axis=0, keepdims=True) * inv_n
            scale = gamma_ref[l] * lax.rsqrt(var + _EPS)   # rsqrt -> EUP slot
            h_scr[...] = (d * scale + beta_ref[l]) * mask
        # linear_prediction (node task): bf16 inputs, f32 accumulation.
        out_ref[...] = (
            jnp.dot(h_scr[...].astype(jnp.bfloat16), w_ref[...],
                    preferred_element_type=jnp.float32)
            + b_ref[...]
        )

    return kernel


def _vmem_cap_bytes() -> int:
    # Generation-aware cap: leave ~20% headroom for compiler internal scratch
    # (~51 MiB on v7x's 64 MiB, ~102 MiB on v5e/v6e's 128 MiB).
    try:
        cap = int(pltpu.get_tpu_info().vmem_capacity_bytes)
    except Exception:
        cap = 64 << 20  # conservative fallback (v7x-sized)
    return int(cap * 0.8)


def ac_gnn_no_input_forward(x, edge_index, params, *, hidden_dim, num_layers):
    """Pallas forward. x: [N, input_dim] f32, edge_index: [2, E] int32."""
    N, input_dim = x.shape
    out_dim = params["w_pred"].shape[1]
    Np = _round_up(N, _LANE)            # lane-dense node count (rows AND MXU K)
    Hp = _round_up(hidden_dim, _LANE)   # lane-dense hidden width
    Op = _round_up(out_dim, _LANE)      # lane-dense output width

    # --- glue (plain JAX): padding + sparse->dense adjacency ----------------
    # nn.ConstantPad1d((0, hidden_dim - input_dim), 0) plus extra lane/row
    # padding to (Np, Hp); padded rows/cols are provably inert in the kernel.
    h0 = jnp.zeros((Np, Hp), jnp.float32).at[:N, :input_dim].set(
        x.astype(jnp.float32))
    src, dst = edge_index[0], edge_index[1]
    adj = (
        jnp.zeros((Np, Np), jnp.float32).at[dst, src].add(1.0)
    ).astype(jnp.bfloat16)  # edge multiplicities are exact in bf16 up to 256

    gamma = jnp.pad(params["gamma"].astype(jnp.float32),
                    ((0, 0), (0, Hp - hidden_dim)), constant_values=1.0)
    beta = jnp.pad(params["beta"].astype(jnp.float32),
                   ((0, 0), (0, Hp - hidden_dim)))
    gamma = gamma.reshape(num_layers, 1, Hp)
    beta = beta.reshape(num_layers, 1, Hp)
    w = jnp.pad(params["w_pred"].astype(jnp.float32),
                ((0, Hp - hidden_dim), (0, Op - out_dim))).astype(jnp.bfloat16)
    b = jnp.pad(params["b_pred"].astype(jnp.float32),
                (0, Op - out_dim)).reshape(1, Op)

    # VMEM budget: everything is single-buffered (memory_space=VMEM, no
    # pipelining for a single kernel invocation) + scratch + headroom.
    vmem_est = (Np * Hp * 4            # h0
                + Np * Np * 2          # adj (bf16)
                + 2 * num_layers * Hp * 4
                + Hp * Op * 2 + Op * 4
                + Np * Op * 4          # out
                + Np * Hp * 4          # h scratch
                + (4 << 20))           # headroom
    vmem_limit = int(min(max(vmem_est, 16 << 20), _vmem_cap_bytes()))

    # Single kernel invocation: every operand lives once in VMEM (no pointless
    # double-buffering), the kernel sees full-array refs.
    vmem_spec = pl.BlockSpec(memory_space=pltpu.MemorySpace.VMEM)
    out_padded = pl.pallas_call(
        _make_kernel(num_layers, N, Np),
        out_shape=jax.ShapeDtypeStruct((Np, Op), jnp.float32),
        in_specs=[vmem_spec] * 6,
        out_specs=vmem_spec,
        scratch_shapes=[pltpu.VMEM((Np, Hp), jnp.float32)],
        compiler_params=pltpu.CompilerParams(vmem_limit_bytes=vmem_limit),
    )(h0, adj, gamma, beta, w, b)
    # strip row/lane padding outside the kernel
    return out_padded[:N, :out_dim]


def reference_forward(x, edge_index, params, *, hidden_dim, num_layers):
    """Pure-JAX f32 reference of the same module semantics."""
    N = x.shape[0]
    h = jnp.pad(x.astype(jnp.float32), ((0, 0), (0, hidden_dim - x.shape[1])))
    src, dst = edge_index[0], edge_index[1]
    adj = jnp.zeros((N, N), jnp.float32).at[dst, src].add(1.0)
    for l in range(num_layers):
        h = jnp.maximum(h + adj @ h, 0.0)
        mean = h.mean(axis=0, keepdims=True)
        var = ((h - mean) ** 2).mean(axis=0, keepdims=True)
        h = (h - mean) / jnp.sqrt(var + _EPS)
        h = h * params["gamma"][l][None, :] + params["beta"][l][None, :]
    return h @ params["w_pred"] + params["b_pred"][None, :]


if __name__ == "__main__":
    key = jax.random.PRNGKey(0)
    N, E = 64, 256
    input_dim, hidden_dim, output_dim, num_layers = 4, 32, 8, 2

    k_x, k_e, k_w, k_b = jax.random.split(key, 4)
    x = jax.random.normal(k_x, (N, input_dim), jnp.float32)
    edge_index = jax.random.randint(k_e, (2, E), 0, N, dtype=jnp.int32)
    batch = jnp.zeros((N,), jnp.int32)  # single graph; unused for the node task

    # deterministic parameter init (BatchNorm affine defaults + random linear head)
    params = {
        "gamma": jnp.ones((num_layers, hidden_dim), jnp.float32),
        "beta": jnp.zeros((num_layers, hidden_dim), jnp.float32),
        "w_pred": jax.random.normal(k_w, (hidden_dim, output_dim), jnp.float32)
        * (1.0 / np.sqrt(hidden_dim)),
        "b_pred": jax.random.normal(k_b, (output_dim,), jnp.float32) * 0.01,
    }

    out = ac_gnn_no_input_forward(
        x, edge_index, params, hidden_dim=hidden_dim, num_layers=num_layers
    )
    out = jax.block_until_ready(out)

    ref = reference_forward(
        x, edge_index, params, hidden_dim=hidden_dim, num_layers=num_layers
    )
    # Looser tolerance: aggregation and head matmuls run bf16 on the MXU
    # (f32 accumulation), so activations drift slightly from the f32 reference.
    np.testing.assert_allclose(np.asarray(out), np.asarray(ref), rtol=5e-2, atol=5e-2)
    print("KERNEL_OK")
</pallas_src>

<mosaic_0001>
module attributes {stable_mosaic.version = 11 : i64} {
  func.func @kernel(%arg0: memref<128x128xf32, #tpu.memory_space<vmem>>, %arg1: memref<128x128xbf16, #tpu.memory_space<vmem>>, %arg2: memref<2x1x128xf32, #tpu.memory_space<vmem>>, %arg3: memref<2x1x128xf32, #tpu.memory_space<vmem>>, %arg4: memref<128x128xbf16, #tpu.memory_space<vmem>>, %arg5: memref<1x128xf32, #tpu.memory_space<vmem>>, %arg6: memref<128x128xf32, #tpu.memory_space<vmem>>, %arg7: memref<128x128xf32, #tpu.memory_space<vmem>>) attributes {dimension_semantics = [], scalar_prefetch = 0 : i64, scratch_operands = 1 : i64, tpu.core_type = #tpu.core_type<tc>} {
    %0 = tpu.iota {dimensions = array<i32: 0>} : vector<128x1xi32>
    %c64_i32 = arith.constant 64 : i32
    %1 = vector.broadcast %c64_i32 : i32 to vector<128x1xi32>
    %2 = arith.cmpi slt, %0, %1 : vector<128x1xi32>
    %3 = arith.extui %2 : vector<128x1xi1> to vector<128x1xi32>
    %4 = arith.sitofp %3 : vector<128x1xi32> to vector<128x1xf32>
    %c0 = arith.constant 0 : index
    %c0_0 = arith.constant 0 : index
    %5 = vector.load %arg0[%c0, %c0_0] : memref<128x128xf32, #tpu.memory_space<vmem>>, vector<128x128xf32>
    %c0_1 = arith.constant 0 : index
    %c0_2 = arith.constant 0 : index
    %6 = vector.load %arg7[%c0_1, %c0_2] : memref<128x128xf32, #tpu.memory_space<vmem>>, vector<128x128xf32>
    tpu.vector_store %arg7[%c0_1, %c0_2], %5 {strides = array<i32>} : memref<128x128xf32, #tpu.memory_space<vmem>>, vector<128x128xf32>,
    %c0_3 = arith.constant 0 : index
    %c0_4 = arith.constant 0 : index
    %7 = vector.load %arg7[%c0_3, %c0_4] : memref<128x128xf32, #tpu.memory_space<vmem>>, vector<128x128xf32>
    %c0_5 = arith.constant 0 : index
    %c0_6 = arith.constant 0 : index
    %8 = vector.load %arg1[%c0_5, %c0_6] : memref<128x128xbf16, #tpu.memory_space<vmem>>, vector<128x128xbf16>
    %9 = arith.truncf %7 : vector<128x128xf32> to vector<128x128xbf16>
    %cst = arith.constant dense<0.000000e+00> : vector<128x128xf32>
    %10 = tpu.matmul %8, %9, %cst {dimension_numbers = #tpu.dot_dimension_numbers<[1], [0], [0], [1], [0, 0, 1, 1], [], []>} : vector<128x128xbf16>, vector<128x128xbf16>, vector<128x128xf32> -> vector<128x128xf32>
    %11 = arith.addf %7, %10 : vector<128x128xf32>
    %cst_7 = arith.constant 0.000000e+00 : f32
    %12 = vector.broadcast %cst_7 : f32 to vector<128x128xf32>
    %13 = arith.maximumf %11, %12 : vector<128x128xf32>
    %cst_8 = arith.constant dense<0.000000e+00> : vector<128xf32>
    %14 = vector.multi_reduction <add>, %13, %cst_8 [0] : vector<128x128xf32> to vector<128xf32>
    %15 = vector.shape_cast %14 : vector<128xf32> to vector<1x128xf32>
    %cst_9 = arith.constant 1.562500e-02 : f32
    %16 = vector.broadcast %cst_9 : f32 to vector<1x128xf32>
    %17 = arith.mulf %15, %16 : vector<1x128xf32>
    %18 = vector.broadcast %17 : vector<1x128xf32> to vector<128x128xf32>
    %19 = arith.subf %13, %18 : vector<128x128xf32>
    %20 = vector.broadcast %4 : vector<128x1xf32> to vector<128x128xf32>
    %21 = arith.mulf %19, %20 : vector<128x128xf32>
    %22 = arith.mulf %21, %21 : vector<128x128xf32>
    %cst_10 = arith.constant dense<0.000000e+00> : vector<128xf32>
    %23 = vector.multi_reduction <add>, %22, %cst_10 [0] : vector<128x128xf32> to vector<128xf32>
    %24 = vector.shape_cast %23 : vector<128xf32> to vector<1x128xf32>
    %cst_11 = arith.constant 1.562500e-02 : f32
    %25 = vector.broadcast %cst_11 : f32 to vector<1x128xf32>
    %26 = arith.mulf %24, %25 : vector<1x128xf32>
    %c0_12 = arith.constant 0 : index
    %c0_13 = arith.constant 0 : index
    %c0_14 = arith.constant 0 : index
    %27 = vector.load %arg2[%c0_12, %c0_13, %c0_14] : memref<2x1x128xf32, #tpu.memory_space<vmem>>, vector<1x1x128xf32>
    %28 = vector.shape_cast %27 : vector<1x1x128xf32> to vector<1x128xf32>
    %cst_15 = arith.constant 9.99999974E-6 : f32
    %29 = vector.broadcast %cst_15 : f32 to vector<1x128xf32>
    %30 = arith.addf %26, %29 : vector<1x128xf32>
    %31 = math.rsqrt %30 : vector<1x128xf32>
    %32 = arith.mulf %28, %31 : vector<1x128xf32>
    %33 = vector.broadcast %32 : vector<1x128xf32> to vector<128x128xf32>
    %34 = arith.mulf %21, %33 : vector<128x128xf32>
    %c0_16 = arith.constant 0 : index
    %c0_17 = arith.constant 0 : index
    %c0_18 = arith.constant 0 : index
    %35 = vector.load %arg3[%c0_16, %c0_17, %c0_18] : memref<2x1x128xf32, #tpu.memory_space<vmem>>, vector<1x1x128xf32>
    %36 = vector.shape_cast %35 : vector<1x1x128xf32> to vector<1x128xf32>
    %37 = vector.broadcast %36 : vector<1x128xf32> to vector<128x128xf32>
    %38 = arith.addf %34, %37 : vector<128x128xf32>
    %39 = vector.broadcast %4 : vector<128x1xf32> to vector<128x128xf32>
    %40 = arith.mulf %38, %39 : vector<128x128xf32>
    %c0_19 = arith.constant 0 : index
    %c0_20 = arith.constant 0 : index
    %41 = vector.load %arg7[%c0_19, %c0_20] : memref<128x128xf32, #tpu.memory_space<vmem>>, vector<128x128xf32>
    tpu.vector_store %arg7[%c0_19, %c0_20], %40 {strides = array<i32>} : memref<128x128xf32, #tpu.memory_space<vmem>>, vector<128x128xf32>,
    %c0_21 = arith.constant 0 : index
    %c0_22 = arith.constant 0 : index
    %42 = vector.load %arg7[%c0_21, %c0_22] : memref<128x128xf32, #tpu.memory_space<vmem>>, vector<128x128xf32>
    %c0_23 = arith.constant 0 : index
    %c0_24 = arith.constant 0 : index
    %43 = vector.load %arg1[%c0_23, %c0_24] : memref<128x128xbf16, #tpu.memory_space<vmem>>, vector<128x128xbf16>
    %44 = arith.truncf %42 : vector<128x128xf32> to vector<128x128xbf16>
    %cst_25 = arith.constant dense<0.000000e+00> : vector<128x128xf32>
    %45 = tpu.matmul %43, %44, %cst_25 {dimension_numbers = #tpu.dot_dimension_numbers<[1], [0], [0], [1], [0, 0, 1, 1], [], []>} : vector<128x128xbf16>, vector<128x128xbf16>, vector<128x128xf32> -> vector<128x128xf32>
    %46 = arith.addf %42, %45 : vector<128x128xf32>
    %cst_26 = arith.constant 0.000000e+00 : f32
    %47 = vector.broadcast %cst_26 : f32 to vector<128x128xf32>
    %48 = arith.maximumf %46, %47 : vector<128x128xf32>
    %cst_27 = arith.constant dense<0.000000e+00> : vector<128xf32>
    %49 = vector.multi_reduction <add>, %48, %cst_27 [0] : vector<128x128xf32> to vector<128xf32>
    %50 = vector.shape_cast %49 : vector<128xf32> to vector<1x128xf32>
    %cst_28 = arith.constant 1.562500e-02 : f32
    %51 = vector.broadcast %cst_28 : f32 to vector<1x128xf32>
    %52 = arith.mulf %50, %51 : vector<1x128xf32>
    %53 = vector.broadcast %52 : vector<1x128xf32> to vector<128x128xf32>
    %54 = arith.subf %48, %53 : vector<128x128xf32>
    %55 = vector.broadcast %4 : vector<128x1xf32> to vector<128x128xf32>
    %56 = arith.mulf %54, %55 : vector<128x128xf32>
    %57 = arith.mulf %56, %56 : vector<128x128xf32>
    %cst_29 = arith.constant dense<0.000000e+00> : vector<128xf32>
    %58 = vector.multi_reduction <add>, %57, %cst_29 [0] : vector<128x128xf32> to vector<128xf32>
    %59 = vector.shape_cast %58 : vector<128xf32> to vector<1x128xf32>
    %cst_30 = arith.constant 1.562500e-02 : f32
    %60 = vector.broadcast %cst_30 : f32 to vector<1x128xf32>
    %61 = arith.mulf %59, %60 : vector<1x128xf32>
    %c1 = arith.constant 1 : index
    %c0_31 = arith.constant 0 : index
    %c0_32 = arith.constant 0 : index
    %62 = vector.load %arg2[%c1, %c0_31, %c0_32] : memref<2x1x128xf32, #tpu.memory_space<vmem>>, vector<1x1x128xf32>
    %63 = vector.shape_cast %62 : vector<1x1x128xf32> to vector<1x128xf32>
    %cst_33 = arith.constant 9.99999974E-6 : f32
    %64 = vector.broadcast %cst_33 : f32 to vector<1x128xf32>
    %65 = arith.addf %61, %64 : vector<1x128xf32>
    %66 = math.rsqrt %65 : vector<1x128xf32>
    %67 = arith.mulf %63, %66 : vector<1x128xf32>
    %68 = vector.broadcast %67 : vector<1x128xf32> to vector<128x128xf32>
    %69 = arith.mulf %56, %68 : vector<128x128xf32>
    %c1_34 = arith.constant 1 : index
    %c0_35 = arith.constant 0 : index
    %c0_36 = arith.constant 0 : index
    %70 = vector.load %arg3[%c1_34, %c0_35, %c0_36] : memref<2x1x128xf32, #tpu.memory_space<vmem>>, vector<1x1x128xf32>
    %71 = vector.shape_cast %70 : vector<1x1x128xf32> to vector<1x128xf32>
    %72 = vector.broadcast %71 : vector<1x128xf32> to vector<128x128xf32>
    %73 = arith.addf %69, %72 : vector<128x128xf32>
    %74 = vector.broadcast %4 : vector<128x1xf32> to vector<128x128xf32>
    %75 = arith.mulf %73, %74 : vector<128x128xf32>
    %c0_37 = arith.constant 0 : index
    %c0_38 = arith.constant 0 : index
    %76 = vector.load %arg7[%c0_37, %c0_38] : memref<128x128xf32, #tpu.memory_space<vmem>>, vector<128x128xf32>
    tpu.vector_store %arg7[%c0_37, %c0_38], %75 {strides = array<i32>} : memref<128x128xf32, #tpu.memory_space<vmem>>, vector<128x128xf32>,
    %c0_39 = arith.constant 0 : index
    %c0_40 = arith.constant 0 : index
    %77 = vector.load %arg7[%c0_39, %c0_40] : memref<128x128xf32, #tpu.memory_space<vmem>>, vector<128x128xf32>
    %78 = arith.truncf %77 : vector<128x128xf32> to vector<128x128xbf16>
    %c0_41 = arith.constant 0 : index
    %c0_42 = arith.constant 0 : index
    %79 = vector.load %arg4[%c0_41, %c0_42] : memref<128x128xbf16, #tpu.memory_space<vmem>>, vector<128x128xbf16>
    %cst_43 = arith.constant dense<0.000000e+00> : vector<128x128xf32>
    %80 = tpu.matmul %78, %79, %cst_43 {dimension_numbers = #tpu.dot_dimension_numbers<[1], [0], [0], [1], [0, 0, 1, 1], [], []>} : vector<128x128xbf16>, vector<128x128xbf16>, vector<128x128xf32> -> vector<128x128xf32>
    %c0_44 = arith.constant 0 : index
    %c0_45 = arith.constant 0 : index
    %81 = vector.load %arg5[%c0_44, %c0_45] : memref<1x128xf32, #tpu.memory_space<vmem>>, vector<1x128xf32>
    %82 = vector.broadcast %81 : vector<1x128xf32> to vector<128x128xf32>
    %83 = arith.addf %80, %82 : vector<128x128xf32>
    %c0_46 = arith.constant 0 : index
    %c0_47 = arith.constant 0 : index
    %84 = vector.load %arg6[%c0_46, %c0_47] : memref<128x128xf32, #tpu.memory_space<vmem>>, vector<128x128xf32>
    tpu.vector_store %arg6[%c0_46, %c0_47], %83 {strides = array<i32>} : memref<128x128xf32, #tpu.memory_space<vmem>>, vector<128x128xf32>,
    return
  }
}

</mosaic_0001>

<llo_original>
// kernel: tpu_custom_call.1
$region0: #{tpu_custom_call.1}
  #allocation0 [shape = 'u32[]', space=smem, size = 0x4, offset = 0x4, fixed_abs, tag = 'smem constant byte address 0x4 - core index']
  #allocation1 [shape = 'u32[144,128]{1,0:T(1,128)}', space=vmem, size = 0x12000, scoped, tag = 'internal scratch']
  #allocation2 [shape = 'f32[128,128]{1,0:T(8,128)}', space=vmem, size = 0x10000, scoped, tag = 'scratch operand']
  %s0 = inlined_call_operand.hbm [shape: f32[128,128], index: 0, kind: input, shape index: {}]
  %s1 = inlined_call_operand.hbm [shape: bf16[128,128], index: 1, kind: input, shape index: {}]
  %s2 = inlined_call_operand.vmem [shape: f32[2,1,128], index: 2, kind: input, shape index: {}]
  %s3 = inlined_call_operand.vmem [shape: f32[2,1,128], index: 3, kind: input, shape index: {}]
  %s4 = inlined_call_operand.hbm [shape: bf16[128,128], index: 4, kind: input, shape index: {}]
  %s5 = inlined_call_operand.vmem [shape: f32[1,128], index: 5, kind: input, shape index: {}]
  %s6 = inlined_call_operand.hbm [shape: f32[128,128], index: 6, kind: output, shape index: {}]
  %s7 = sld [smem:[#allocation0]]
  $region46: #{tpu_custom_call.1} parent=0
    _
  %s9 = ssub.s32 1, %s7
  %s10 = scalar_select 0, %s9, %s7
  $region1: #{tpu_custom_call.1} parent=0
    #allocation3 [shape = 'u8[65536]{0}', space=vmem, size = 0x10000, scoped, tag = 'input window, operand 0, single buffered']
    #allocation4 [shape = 's32[1]{0}', space=sflag, size = 0x4, scoped, tag = 'scoped memory for tpu_custom_call.1']
    #allocation5 [shape = 's32[1]{0}', space=sflag, size = 0x4, scoped, tag = 'scoped memory for tpu_custom_call.1']
    #allocation6 [shape = 'u8[32768]{0}', space=vmem, size = 0x8000, scoped, tag = 'input window, operand 1, single buffered']
    #allocation7 [shape = 's32[1]{0}', space=sflag, size = 0x4, scoped, tag = 'scoped memory for tpu_custom_call.1']
    #allocation8 [shape = 'u8[32768]{0}', space=vmem, size = 0x8000, scoped, tag = 'input window, operand 4, single buffered']
    #allocation9 [shape = 'u8[65536]{0}', space=vmem, size = 0x10000, scoped, tag = 'output window, operand 0, single buffered']
    %11 = vsyncpa [#allocation4], 0
    %12 = vsyncpa [#allocation7], 0
    %13 = vsyncpa [#allocation5], 0
    // Predicated region
    $region2: #{tpu_custom_call.1} parent=1 // pred_check
      _
    $region3: #{tpu_custom_call.1} parent=1 // pred_check_branch
      %15 = sbr.rel (0) target = $region5
    $region4: #{tpu_custom_call.1} parent=1 // pred_region
      %s17 = ssub.s32 2048, 2048
      %18 = vsyncadd [#allocation4], %s17
      %s19 = sshll.u32 [#allocation3], 4
      %s20 = int_to_ptr.vmem [resolvable:$true] %s19
      %25 = dma.hbm_to_vmem [thread:$0]  %s0, 2048, %s20, [#allocation4], 128, 128, 8
    $region5: #{tpu_custom_call.1} parent=1 // pred_fallthru
      _
    // Predicated region
    $region6: #{tpu_custom_call.1} parent=1 // pred_check
      _
    $region7: #{tpu_custom_call.1} parent=1 // pred_check_branch
      %27 = sbr.rel (0) target = $region9
    $region8: #{tpu_custom_call.1} parent=1 // pred_region
      %s29 = ssub.s32 1024, 1024
      %30 = vsyncadd [#allocation7], %s29
      %s31 = sshll.u32 [#allocation6], 4
      %s32 = int_to_ptr.vmem [resolvable:$true] %s31
      %37 = dma.hbm_to_vmem [thread:$0]  %s1, 1024, %s32, [#allocation7], 64, 64, 4
    $region9: #{tpu_custom_call.1} parent=1 // pred_fallthru
      _
    // Predicated region
    $region10: #{tpu_custom_call.1} parent=1 // pred_check
      _
    $region11: #{tpu_custom_call.1} parent=1 // pred_check_branch
      %39 = sbr.rel (0) target = $region13
    $region12: #{tpu_custom_call.1} parent=1 // pred_region
      _
    $region13: #{tpu_custom_call.1} parent=1 // pred_fallthru
      _
    // Predicated region
    $region14: #{tpu_custom_call.1} parent=1 // pred_check
      _
    $region15: #{tpu_custom_call.1} parent=1 // pred_check_branch
      %41 = sbr.rel (0) target = $region17
    $region16: #{tpu_custom_call.1} parent=1 // pred_region
      _
    $region17: #{tpu_custom_call.1} parent=1 // pred_fallthru
      _
    // Predicated region
    $region18: #{tpu_custom_call.1} parent=1 // pred_check
      _
    $region19: #{tpu_custom_call.1} parent=1 // pred_check_branch
      %43 = sbr.rel (0) target = $region21
    $region20: #{tpu_custom_call.1} parent=1 // pred_region
      %s45 = ssub.s32 1024, 1024
      %46 = vsyncadd [#allocation7], %s45
      %s47 = sshll.u32 [#allocation8], 4
      %s48 = int_to_ptr.vmem [resolvable:$true] %s47
      %53 = dma.hbm_to_vmem [thread:$0]  %s4, 1024, %s48, [#allocation7], 64, 64, 4
    $region21: #{tpu_custom_call.1} parent=1 // pred_fallthru
      _
    // Predicated region
    $region22: #{tpu_custom_call.1} parent=1 // pred_check
      _
    $region23: #{tpu_custom_call.1} parent=1 // pred_check_branch
      %55 = sbr.rel (0) target = $region25
    $region24: #{tpu_custom_call.1} parent=1 // pred_region
      _
    $region25: #{tpu_custom_call.1} parent=1 // pred_fallthru
      _
    // Predicated region
    $region26: #{tpu_custom_call.1} parent=1 // pred_check
      _
    $region27: #{tpu_custom_call.1} parent=1 // pred_check_branch
      %57 = sbr.rel (0) target = $region29
    $region28: #{tpu_custom_call.1} parent=1 // pred_region
      %58 = dma.done [#allocation4], 2048
    $region29: #{tpu_custom_call.1} parent=1 // pred_fallthru
      _
    // Predicated region
    $region30: #{tpu_custom_call.1} parent=1 // pred_check
      _
    $region31: #{tpu_custom_call.1} parent=1 // pred_check_branch
      %60 = sbr.rel (0) target = $region33
    $region32: #{tpu_custom_call.1} parent=1 // pred_region
      %61 = dma.done [#allocation7], 1024
    $region33: #{tpu_custom_call.1} parent=1 // pred_fallthru
      _
    // Predicated region
    $region34: #{tpu_custom_call.1} parent=1 // pred_check
      _
    $region35: #{tpu_custom_call.1} parent=1 // pred_check_branch
      %63 = sbr.rel (0) target = $region37
    $region36: #{tpu_custom_call.1} parent=1 // pred_region
      %64 = dma.done [#allocation7], 1024
    $region37: #{tpu_custom_call.1} parent=1 // pred_fallthru
      _
    %v66 = vlaneseq
    %v67 = vshrl.u32 %v66, 7
    %v68 = vadd.s32 %v67, 8
    %v69 = vadd.s32 %v67, 16
    %v70 = vadd.s32 %v67, 24
    %v71 = vadd.s32 %v67, 32
    %v72 = vadd.s32 %v67, 40
    %v73 = vadd.s32 %v67, 48
    %v74 = vadd.s32 %v67, 56
    %v75 = vadd.s32 %v67, 64
    %v76 = vadd.s32 %v67, 72
    %v77 = vadd.s32 %v67, 80
    %v78 = vadd.s32 %v67, 88
    %v79 = vadd.s32 %v67, 96
    %v80 = vadd.s32 %v67, 104
    %v81 = vadd.s32 %v67, 112
    %v82 = vadd.s32 %v67, 120
    %vm83 = vcmp.lt.s32.totalorder %v67, 64
    %vm84 = vcmp.lt.s32.totalorder %v68, 64
    %vm85 = vcmp.lt.s32.totalorder %v69, 64
    %vm86 = vcmp.lt.s32.totalorder %v70, 64
    %vm87 = vcmp.lt.s32.totalorder %v71, 64
    %vm88 = vcmp.lt.s32.totalorder %v72, 64
    %vm89 = vcmp.lt.s32.totalorder %v73, 64
    %vm90 = vcmp.lt.s32.totalorder %v74, 64
    %vm91 = vcmp.lt.s32.totalorder %v75, 64
    %vm92 = vcmp.lt.s32.totalorder %v76, 64
    %vm93 = vcmp.lt.s32.totalorder %v77, 64
    %vm94 = vcmp.lt.s32.totalorder %v78, 64
    %vm95 = vcmp.lt.s32.totalorder %v79, 64
    %vm96 = vcmp.lt.s32.totalorder %v80, 64
    %vm97 = vcmp.lt.s32.totalorder %v81, 64
    %vm98 = vcmp.lt.s32.totalorder %v82, 64
    %v99 = vsel %vm83, 1, 0
    %v100 = vsel %vm84, 1, 0
    %v101 = vsel %vm85, 1, 0
    %v102 = vsel %vm86, 1, 0
    %v103 = vsel %vm87, 1, 0
    %v104 = vsel %vm88, 1, 0
    %v105 = vsel %vm89, 1, 0
    %v106 = vsel %vm90, 1, 0
    %v107 = vsel %vm91, 1, 0
    %v108 = vsel %vm92, 1, 0
    %v109 = vsel %vm93, 1, 0
    %v110 = vsel %vm94, 1, 0
    %v111 = vsel %vm95, 1, 0
    %v112 = vsel %vm96, 1, 0
    %v113 = vsel %vm97, 1, 0
    %v114 = vsel %vm98, 1, 0
    %v115 = vcvt.s32.f32 %v99
    %v116 = vcvt.s32.f32 %v100
    %v117 = vcvt.s32.f32 %v101
    %v118 = vcvt.s32.f32 %v102
    %v119 = vcvt.s32.f32 %v103
    %v120 = vcvt.s32.f32 %v104
    %v121 = vcvt.s32.f32 %v105
    %v122 = vcvt.s32.f32 %v106
    %v123 = vcvt.s32.f32 %v107
    %v124 = vcvt.s32.f32 %v108
    %v125 = vcvt.s32.f32 %v109
    %v126 = vcvt.s32.f32 %v110
    %v127 = vcvt.s32.f32 %v111
    %v128 = vcvt.s32.f32 %v112
    %v129 = vcvt.s32.f32 %v113
    %v130 = vcvt.s32.f32 %v114
    %v131 = vld [vmem:[#allocation3] sm:$0xff]
    %v132 = vld [vmem:[#allocation3 + $0x8] sm:$0xff]
    %v133 = vld [vmem:[#allocation3 + $0x10] sm:$0xff]
    %v134 = vld [vmem:[#allocation3 + $0x18] sm:$0xff]
    %v135 = vld [vmem:[#allocation3 + $0x20] sm:$0xff]
    %v136 = vld [vmem:[#allocation3 + $0x28] sm:$0xff]
    %v137 = vld [vmem:[#allocation3 + $0x30] sm:$0xff]
    %v138 = vld [vmem:[#allocation3 + $0x38] sm:$0xff]
    %v139 = vld [vmem:[#allocation3 + $0x40] sm:$0xff]
    %v140 = vld [vmem:[#allocation3 + $0x48] sm:$0xff]
    %v141 = vld [vmem:[#allocation3 + $0x50] sm:$0xff]
    %v142 = vld [vmem:[#allocation3 + $0x58] sm:$0xff]
    %v143 = vld [vmem:[#allocation3 + $0x60] sm:$0xff]
    %v144 = vld [vmem:[#allocation3 + $0x68] sm:$0xff]
    %v145 = vld [vmem:[#allocation3 + $0x70] sm:$0xff]
    %v146 = vld [vmem:[#allocation3 + $0x78] sm:$0xff]
    %147 = vst [vmem:[#allocation2] sm:$0xff] %v131
    %148 = vst [vmem:[#allocation2 + $0x8] sm:$0xff] %v132
    %149 = vst [vmem:[#allocation2 + $0x10] sm:$0xff] %v133
    %150 = vst [vmem:[#allocation2 + $0x18] sm:$0xff] %v134
    %151 = vst [vmem:[#allocation2 + $0x20] sm:$0xff] %v135
    %152 = vst [vmem:[#allocation2 + $0x28] sm:$0xff] %v136
    %153 = vst [vmem:[#allocation2 + $0x30] sm:$0xff] %v137
    %154 = vst [vmem:[#allocation2 + $0x38] sm:$0xff] %v138
    %155 = vst [vmem:[#allocation2 + $0x40] sm:$0xff] %v139
    %156 = vst [vmem:[#allocation2 + $0x48] sm:$0xff] %v140
    %157 = vst [vmem:[#allocation2 + $0x50] sm:$0xff] %v141
    %158 = vst [vmem:[#allocation2 + $0x58] sm:$0xff] %v142
    %159 = vst [vmem:[#allocation2 + $0x60] sm:$0xff] %v143
    %160 = vst [vmem:[#allocation2 + $0x68] sm:$0xff] %v144
    %161 = vst [vmem:[#allocation2 + $0x70] sm:$0xff] %v145
    %162 = vst [vmem:[#allocation2 + $0x78] sm:$0xff] %v146
    %v163 = vld [vmem:[#allocation2] sm:$0xff]
    %v164 = vld [vmem:[#allocation2 + $0x8] sm:$0xff]
    %v165 = vld [vmem:[#allocation2 + $0x10] sm:$0xff]
    %v166 = vld [vmem:[#allocation2 + $0x18] sm:$0xff]
    %v167 = vld [vmem:[#allocation2 + $0x20] sm:$0xff]
    %v168 = vld [vmem:[#allocation2 + $0x28] sm:$0xff]
    %v169 = vld [vmem:[#allocation2 + $0x30] sm:$0xff]
    %v170 = vld [vmem:[#allocation2 + $0x38] sm:$0xff]
    %v171 = vld [vmem:[#allocation2 + $0x40] sm:$0xff]
    %v172 = vld [vmem:[#allocation2 + $0x48] sm:$0xff]
    %v173 = vld [vmem:[#allocation2 + $0x50] sm:$0xff]
    %v174 = vld [vmem:[#allocation2 + $0x58] sm:$0xff]
    %v175 = vld [vmem:[#allocation2 + $0x60] sm:$0xff]
    %v176 = vld [vmem:[#allocation2 + $0x68] sm:$0xff]
    %v177 = vld [vmem:[#allocation2 + $0x70] sm:$0xff]
    %v178 = vld [vmem:[#allocation2 + $0x78] sm:$0xff]
    %v179 = vld [vmem:[#allocation6] sm:$0xf]
    %v180 = vld [vmem:[#allocation6 + $0x4] sm:$0xf]
    %v181 = vld [vmem:[#allocation6 + $0x8] sm:$0xf]
    %v182 = vld [vmem:[#allocation6 + $0xc] sm:$0xf]
    %v183 = vld [vmem:[#allocation6 + $0x10] sm:$0xf]
    %v184 = vld [vmem:[#allocation6 + $0x14] sm:$0xf]
    %v185 = vld [vmem:[#allocation6 + $0x18] sm:$0xf]
    %v186 = vld [vmem:[#allocation6 + $0x1c] sm:$0xf]
    %v187 = vld [vmem:[#allocation6 + $0x20] sm:$0xf]
    %v188 = vld [vmem:[#allocation6 + $0x24] sm:$0xf]
    %v189 = vld [vmem:[#allocation6 + $0x28] sm:$0xf]
    %v190 = vld [vmem:[#allocation6 + $0x2c] sm:$0xf]
    %v191 = vld [vmem:[#allocation6 + $0x30] sm:$0xf]
    %v192 = vld [vmem:[#allocation6 + $0x34] sm:$0xf]
    %v193 = vld [vmem:[#allocation6 + $0x38] sm:$0xf]
    %v194 = vld [vmem:[#allocation6 + $0x3c] sm:$0xf]
    %v195 = vpack.c.bf16 %v164, %v163
    %v196 = vpack.c.bf16 %v166, %v165
    %v197 = vpack.c.bf16 %v168, %v167
    %v198 = vpack.c.bf16 %v170, %v169
    %v199 = vpack.c.bf16 %v172, %v171
    %v200 = vpack.c.bf16 %v174, %v173
    %v201 = vpack.c.bf16 %v176, %v175
    %v202 = vpack.c.bf16 %v178, %v177
    %v219 = vunpack.c.l.b16 %v179
    %v220 = vunpack.c.l.b16 %v180
    %v221 = vunpack.c.l.b16 %v181
    %v222 = vunpack.c.l.b16 %v182
    %v223 = vunpack.c.l.b16 %v183
    %v224 = vunpack.c.l.b16 %v184
    %v225 = vunpack.c.l.b16 %v185
    %v226 = vunpack.c.l.b16 %v186
    %v227 = vunpack.c.l.b16 %v187
    %v228 = vunpack.c.l.b16 %v188
    %v229 = vunpack.c.l.b16 %v189
    %v230 = vunpack.c.l.b16 %v190
    %v231 = vunpack.c.l.b16 %v191
    %v232 = vunpack.c.l.b16 %v192
    %v233 = vunpack.c.l.b16 %v193
    %v234 = vunpack.c.l.b16 %v194
    %v235 = vpack.c.b16 %v220, %v219
    %v236 = vpack.c.b16 %v222, %v221
    %v237 = vpack.c.b16 %v224, %v223
    %v238 = vpack.c.b16 %v226, %v225
    %v239 = vpack.c.b16 %v228, %v227
    %v240 = vpack.c.b16 %v230, %v229
    %v241 = vpack.c.b16 %v232, %v231
    %v242 = vpack.c.b16 %v234, %v233
    %251 = vmatprep.subr.bf16.mxu0 0
    %252 = vmatpush1.bf16.msra.mxu0 %v202
    %253 = vmatprep.subr.bf16.mxu0 0
    %254 = vmatpush1.bf16.msra.mxu0 %v201
    %255 = vmatprep.subr.bf16.mxu0 0
    %256 = vmatpush1.bf16.msra.mxu0 %v200
    %257 = vmatprep.subr.bf16.mxu0 0
    %258 = vmatpush1.bf16.msra.mxu0 %v199
    %259 = vmatprep.subr.bf16.mxu0 0
    %260 = vmatpush1.bf16.msra.mxu0 %v198
    %261 = vmatprep.subr.bf16.mxu0 0
    %262 = vmatpush1.bf16.msra.mxu0 %v197
    %263 = vmatprep.subr.bf16.mxu0 0
    %264 = vmatpush1.bf16.msra.mxu0 %v196
    %265 = vmatprep.subr.bf16.mxu0 0
    %266 = vmatpush1.bf16.msra.mxu0 %v195
    %267 = vmatprep.subr.bf16.mxu0 0
    %268 = vmatpush2.bf16.msra.mxu0 0
    %269 = vmatprep.subr.bf16.mxu0 0
    %270 = vmatpush2.bf16.msra.mxu0 0
    %271 = vmatprep.subr.bf16.mxu0 0
    %272 = vmatpush2.bf16.msra.mxu0 0
    %273 = vmatprep.subr.bf16.mxu0 0
    %274 = vmatpush2.bf16.msra.mxu0 0
    %275 = vmatprep.subr.bf16.mxu0 0
    %276 = vmatpush2.bf16.msra.mxu0 0
    %277 = vmatprep.subr.bf16.mxu0 0
    %278 = vmatpush2.bf16.msra.mxu0 0
    %279 = vmatprep.subr.bf16.mxu0 0
    %280 = vmatpush2.bf16.msra.mxu0 0
    %281 = vmatprep.subr.bf16.mxu0 0
    %282 = vmatpush2.bf16.msra.mxu0 0
    %283 = vmatprep.mubr.bf16.mxu0 0
    %284 = vmatmul.mubr.bf16.gmra.mxu0 %v235
    %v285 = vpop.f32.mrf.mxu0
    %v286 = vadd.f32 0.0, %v285
    %v287 = vpop.f32.mrf.mxu0
    %v288 = vpop.f32.mrf.mxu0
    %v289 = vadd.f32 0.0, %v288
    %v290 = vpop.f32.mrf.mxu0
    %291 = vmatprep.mubr.bf16.mxu0 0
    %292 = vmatmul.mubr.bf16.gmra.mxu0 %v236
    %v293 = vpop.f32.mrf.mxu0
    %v294 = vadd.f32 0.0, %v293
    %v295 = vpop.f32.mrf.mxu0
    %v296 = vpop.f32.mrf.mxu0
    %v297 = vadd.f32 0.0, %v296
    %v298 = vpop.f32.mrf.mxu0
    %299 = vmatprep.mubr.bf16.mxu0 0
    %300 = vmatmul.mubr.bf16.gmra.mxu0 %v237
    %v301 = vpop.f32.mrf.mxu0
    %v302 = vadd.f32 0.0, %v301
    %v303 = vpop.f32.mrf.mxu0
    %v304 = vpop.f32.mrf.mxu0
    %v305 = vadd.f32 0.0, %v304
    %v306 = vpop.f32.mrf.mxu0
    %307 = vmatprep.mubr.bf16.mxu0 0
    %308 = vmatmul.mubr.bf16.gmra.mxu0 %v238
    %v309 = vpop.f32.mrf.mxu0
    %v310 = vadd.f32 0.0, %v309
    %v311 = vpop.f32.mrf.mxu0
    %v312 = vpop.f32.mrf.mxu0
    %v313 = vadd.f32 0.0, %v312
    %v314 = vpop.f32.mrf.mxu0
    %315 = vmatprep.mubr.bf16.mxu0 0
    %316 = vmatmul.mubr.bf16.gmra.mxu0 %v239
    %v317 = vpop.f32.mrf.mxu0
    %v318 = vadd.f32 0.0, %v317
    %v319 = vpop.f32.mrf.mxu0
    %v320 = vpop.f32.mrf.mxu0
    %v321 = vadd.f32 0.0, %v320
    %v322 = vpop.f32.mrf.mxu0
    %323 = vmatprep.mubr.bf16.mxu0 0
    %324 = vmatmul.mubr.bf16.gmra.mxu0 %v240
    %v325 = vpop.f32.mrf.mxu0
    %v326 = vadd.f32 0.0, %v325
    %v327 = vpop.f32.mrf.mxu0
    %v328 = vpop.f32.mrf.mxu0
    %v329 = vadd.f32 0.0, %v328
    %v330 = vpop.f32.mrf.mxu0
    %331 = vmatprep.mubr.bf16.mxu0 0
    %332 = vmatmul.mubr.bf16.gmra.mxu0 %v241
    %v333 = vpop.f32.mrf.mxu0
    %v334 = vadd.f32 0.0, %v333
    %v335 = vpop.f32.mrf.mxu0
    %v336 = vpop.f32.mrf.mxu0
    %v337 = vadd.f32 0.0, %v336
    %v338 = vpop.f32.mrf.mxu0
    %339 = vmatprep.mubr.bf16.mxu0 0
    %340 = vmatmul.mubr.bf16.gmra.mxu0 %v242
    %v341 = vpop.f32.mrf.mxu0
    %v342 = vadd.f32 0.0, %v341
    %v343 = vpop.f32.mrf.mxu0
    %v344 = vpop.f32.mrf.mxu0
    %v345 = vadd.f32 0.0, %v344
    %v346 = vpop.f32.mrf.mxu0
    %347 = vdwg.mxu0
    %v348 = vadd.f32 %v163, %v286
    %v349 = vadd.f32 %v164, %v289
    %v350 = vadd.f32 %v165, %v294
    %v351 = vadd.f32 %v166, %v297
    %v352 = vadd.f32 %v167, %v302
    %v353 = vadd.f32 %v168, %v305
    %v354 = vadd.f32 %v169, %v310
    %v355 = vadd.f32 %v170, %v313
    %v356 = vadd.f32 %v171, %v318
    %v357 = vadd.f32 %v172, %v321
    %v358 = vadd.f32 %v173, %v326
    %v359 = vadd.f32 %v174, %v329
    %v360 = vadd.f32 %v175, %v334
    %v361 = vadd.f32 %v176, %v337
    %v362 = vadd.f32 %v177, %v342
    %v363 = vadd.f32 %v178, %v345
    %v364 = vmax.f32 %v348, 0.0
    %v365 = vmax.f32 %v349, 0.0
    %v366 = vmax.f32 %v350, 0.0
    %v367 = vmax.f32 %v351, 0.0
    %v368 = vmax.f32 %v352, 0.0
    %v369 = vmax.f32 %v353, 0.0
    %v370 = vmax.f32 %v354, 0.0
    %v371 = vmax.f32 %v355, 0.0
    %v372 = vmax.f32 %v356, 0.0
    %v373 = vmax.f32 %v357, 0.0
    %v374 = vmax.f32 %v358, 0.0
    %v375 = vmax.f32 %v359, 0.0
    %v376 = vmax.f32 %v360, 0.0
    %v377 = vmax.f32 %v361, 0.0
    %v378 = vmax.f32 %v362, 0.0
    %v379 = vmax.f32 %v363, 0.0
    %v380 = vadd.f32 %v364, %v365
    %v381 = vadd.f32 %v380, %v366
    %v382 = vadd.f32 %v381, %v367
    %v383 = vadd.f32 %v382, %v368
    %v384 = vadd.f32 %v383, %v369
    %v385 = vadd.f32 %v384, %v370
    %v386 = vadd.f32 %v385, %v371
    %v387 = vadd.f32 %v386, %v372
    %v388 = vadd.f32 %v387, %v373
    %v389 = vadd.f32 %v388, %v374
    %v390 = vadd.f32 %v389, %v375
    %v391 = vadd.f32 %v390, %v376
    %v392 = vadd.f32 %v391, %v377
    %v393 = vadd.f32 %v392, %v378
    %v394 = vadd.f32 %v393, %v379
    %v395 = vrot.slane %v394, 4
    %v396 = vadd.f32 %v394, %v395
    %v397 = vrot.slane %v396, 2
    %v398 = vadd.f32 %v396, %v397
    %v399 = vrot.slane %v398, 1
    %v400 = vadd.f32 %v398, %v399
    %v401 = vmul.f32 %v400, 0.015625
    %v402 = vsub.f32 %v364, %v401
    %v403 = vsub.f32 %v365, %v401
    %v404 = vsub.f32 %v366, %v401
    %v405 = vsub.f32 %v367, %v401
    %v406 = vsub.f32 %v368, %v401
    %v407 = vsub.f32 %v369, %v401
    %v408 = vsub.f32 %v370, %v401
    %v409 = vsub.f32 %v371, %v401
    %v410 = vsub.f32 %v372, %v401
    %v411 = vsub.f32 %v373, %v401
    %v412 = vsub.f32 %v374, %v401
    %v413 = vsub.f32 %v375, %v401
    %v414 = vsub.f32 %v376, %v401
    %v415 = vsub.f32 %v377, %v401
    %v416 = vsub.f32 %v378, %v401
    %v417 = vsub.f32 %v379, %v401
    %v418 = vmul.f32 %v402, %v115
    %v419 = vmul.f32 %v403, %v116
    %v420 = vmul.f32 %v404, %v117
    %v421 = vmul.f32 %v405, %v118
    %v422 = vmul.f32 %v406, %v119
    %v423 = vmul.f32 %v407, %v120
    %v424 = vmul.f32 %v408, %v121
    %v425 = vmul.f32 %v409, %v122
    %v426 = vmul.f32 %v410, %v123
    %v427 = vmul.f32 %v411, %v124
    %v428 = vmul.f32 %v412, %v125
    %v429 = vmul.f32 %v413, %v126
    %v430 = vmul.f32 %v414, %v127
    %v431 = vmul.f32 %v415, %v128
    %v432 = vmul.f32 %v416, %v129
    %v433 = vmul.f32 %v417, %v130
    %v434 = vmul.f32 %v418, %v418
    %v435 = vmul.f32 %v419, %v419
    %v436 = vmul.f32 %v420, %v420
    %v437 = vmul.f32 %v421, %v421
    %v438 = vmul.f32 %v422, %v422
    %v439 = vmul.f32 %v423, %v423
    %v440 = vmul.f32 %v424, %v424
    %v441 = vmul.f32 %v425, %v425
    %v442 = vmul.f32 %v426, %v426
    %v443 = vmul.f32 %v427, %v427
    %v444 = vmul.f32 %v428, %v428
    %v445 = vmul.f32 %v429, %v429
    %v446 = vmul.f32 %v430, %v430
    %v447 = vmul.f32 %v431, %v431
    %v448 = vmul.f32 %v432, %v432
    %v449 = vmul.f32 %v433, %v433
    %v450 = vadd.f32 %v434, %v435
    %v451 = vadd.f32 %v450, %v436
    %v452 = vadd.f32 %v451, %v437
    %v453 = vadd.f32 %v452, %v438
    %v454 = vadd.f32 %v453, %v439
    %v455 = vadd.f32 %v454, %v440
    %v456 = vadd.f32 %v455, %v441
    %v457 = vadd.f32 %v456, %v442
    %v458 = vadd.f32 %v457, %v443
    %v459 = vadd.f32 %v458, %v444
    %v460 = vadd.f32 %v459, %v445
    %v461 = vadd.f32 %v460, %v446
    %v462 = vadd.f32 %v461, %v447
    %v463 = vadd.f32 %v462, %v448
    %v464 = vadd.f32 %v463, %v449
    %v465 = vrot.slane %v464, 4
    %v466 = vadd.f32 %v464, %v465
    %v467 = vrot.slane %v466, 2
    %v468 = vadd.f32 %v466, %v467
    %v469 = vrot.slane %v468, 1
    %v470 = vadd.f32 %v468, %v469
    %v471 = vmul.f32 %v470, 0.015625
    %v472 = vld [vmem:[%s2] sm:$0x1]
    %v473 = vadd.f32 %v471, 1e-05
    %v474 = vrsqrt.pop %v473
    %v475 = vmul.f32 %v472, %v474
    %v477 = vlaneseq
    %v478 = vshrl.u32 %v477, 7
    %v479 = vsub.s32 0, %v478
    %v480 = vrot.slane %v475, %v479
    %v482 = vmul.f32 %v418, %v480
    %v483 = vmul.f32 %v419, %v480
    %v484 = vmul.f32 %v420, %v480
    %v485 = vmul.f32 %v421, %v480
    %v486 = vmul.f32 %v422, %v480
    %v487 = vmul.f32 %v423, %v480
    %v488 = vmul.f32 %v424, %v480
    %v489 = vmul.f32 %v425, %v480
    %v490 = vmul.f32 %v426, %v480
    %v491 = vmul.f32 %v427, %v480
    %v492 = vmul.f32 %v428, %v480
    %v493 = vmul.f32 %v429, %v480
    %v494 = vmul.f32 %v430, %v480
    %v495 = vmul.f32 %v431, %v480
    %v496 = vmul.f32 %v432, %v480
    %v497 = vmul.f32 %v433, %v480
    %v498 = vld [vmem:[%s3] sm:$0x1]
    %v500 = vlaneseq
    %v501 = vshrl.u32 %v500, 7
    %v502 = vsub.s32 0, %v501
    %v503 = vrot.slane %v498, %v502
    %v505 = vadd.f32 %v482, %v503
    %v506 = vadd.f32 %v483, %v503
    %v507 = vadd.f32 %v484, %v503
    %v508 = vadd.f32 %v485, %v503
    %v509 = vadd.f32 %v486, %v503
    %v510 = vadd.f32 %v487, %v503
    %v511 = vadd.f32 %v488, %v503
    %v512 = vadd.f32 %v489, %v503
    %v513 = vadd.f32 %v490, %v503
    %v514 = vadd.f32 %v491, %v503
    %v515 = vadd.f32 %v492, %v503
    %v516 = vadd.f32 %v493, %v503
    %v517 = vadd.f32 %v494, %v503
    %v518 = vadd.f32 %v495, %v503
    %v519 = vadd.f32 %v496, %v503
    %v520 = vadd.f32 %v497, %v503
    %v521 = vmul.f32 %v505, %v115
    %v522 = vmul.f32 %v506, %v116
    %v523 = vmul.f32 %v507, %v117
    %v524 = vmul.f32 %v508, %v118
    %v525 = vmul.f32 %v509, %v119
    %v526 = vmul.f32 %v510, %v120
    %v527 = vmul.f32 %v511, %v121
    %v528 = vmul.f32 %v512, %v122
    %v529 = vmul.f32 %v513, %v123
    %v530 = vmul.f32 %v514, %v124
    %v531 = vmul.f32 %v515, %v125
    %v532 = vmul.f32 %v516, %v126
    %v533 = vmul.f32 %v517, %v127
    %v534 = vmul.f32 %v518, %v128
    %v535 = vmul.f32 %v519, %v129
    %v536 = vmul.f32 %v520, %v130
    %537 = vst [vmem:[#allocation2] sm:$0xff] %v521
    %538 = vst [vmem:[#allocation2 + $0x8] sm:$0xff] %v522
    %539 = vst [vmem:[#allocation2 + $0x10] sm:$0xff] %v523
    %540 = vst [vmem:[#allocation2 + $0x18] sm:$0xff] %v524
    %541 = vst [vmem:[#allocation2 + $0x20] sm:$0xff] %v525
    %542 = vst [vmem:[#allocation2 + $0x28] sm:$0xff] %v526
    %543 = vst [vmem:[#allocation2 + $0x30] sm:$0xff] %v527
    %544 = vst [vmem:[#allocation2 + $0x38] sm:$0xff] %v528
    %545 = vst [vmem:[#allocation2 + $0x40] sm:$0xff] %v529
    %546 = vst [vmem:[#allocation2 + $0x48] sm:$0xff] %v530
    %547 = vst [vmem:[#allocation2 + $0x50] sm:$0xff] %v531
    %548 = vst [vmem:[#allocation2 + $0x58] sm:$0xff] %v532
    %549 = vst [vmem:[#allocation2 + $0x60] sm:$0xff] %v533
    %550 = vst [vmem:[#allocation2 + $0x68] sm:$0xff] %v534
    %551 = vst [vmem:[#allocation2 + $0x70] sm:$0xff] %v535
    %552 = vst [vmem:[#allocation2 + $0x78] sm:$0xff] %v536
    %v553 = vld [vmem:[#allocation2] sm:$0xff]
    %v554 = vld [vmem:[#allocation2 + $0x8] sm:$0xff]
    %v555 = vld [vmem:[#allocation2 + $0x10] sm:$0xff]
    %v556 = vld [vmem:[#allocation2 + $0x18] sm:$0xff]
    %v557 = vld [vmem:[#allocation2 + $0x20] sm:$0xff]
    %v558 = vld [vmem:[#allocation2 + $0x28] sm:$0xff]
    %v559 = vld [vmem:[#allocation2 + $0x30] sm:$0xff]
    %v560 = vld [vmem:[#allocation2 + $0x38] sm:$0xff]
    %v561 = vld [vmem:[#allocation2 + $0x40] sm:$0xff]
    %v562 = vld [vmem:[#allocation2 + $0x48] sm:$0xff]
    %v563 = vld [vmem:[#allocation2 + $0x50] sm:$0xff]
    %v564 = vld [vmem:[#allocation2 + $0x58] sm:$0xff]
    %v565 = vld [vmem:[#allocation2 + $0x60] sm:$0xff]
    %v566 = vld [vmem:[#allocation2 + $0x68] sm:$0xff]
    %v567 = vld [vmem:[#allocation2 + $0x70] sm:$0xff]
    %v568 = vld [vmem:[#allocation2 + $0x78] sm:$0xff]
    %v569 = vld [vmem:[#allocation6] sm:$0xf]
    %v570 = vld [vmem:[#allocation6 + $0x4] sm:$0xf]
    %v571 = vld [vmem:[#allocation6 + $0x8] sm:$0xf]
    %v572 = vld [vmem:[#allocation6 + $0xc] sm:$0xf]
    %v573 = vld [vmem:[#allocation6 + $0x10] sm:$0xf]
    %v574 = vld [vmem:[#allocation6 + $0x14] sm:$0xf]
    %v575 = vld [vmem:[#allocation6 + $0x18] sm:$0xf]
    %v576 = vld [vmem:[#allocation6 + $0x1c] sm:$0xf]
    %v577 = vld [vmem:[#allocation6 + $0x20] sm:$0xf]
    %v578 = vld [vmem:[#allocation6 + $0x24] sm:$0xf]
    %v579 = vld [vmem:[#allocation6 + $0x28] sm:$0xf]
    %v580 = vld [vmem:[#allocation6 + $0x2c] sm:$0xf]
    %v581 = vld [vmem:[#allocation6 + $0x30] sm:$0xf]
    %v582 = vld [vmem:[#allocation6 + $0x34] sm:$0xf]
    %v583 = vld [vmem:[#allocation6 + $0x38] sm:$0xf]
    %v584 = vld [vmem:[#allocation6 + $0x3c] sm:$0xf]
    %v585 = vpack.c.bf16 %v554, %v553
    %v586 = vpack.c.bf16 %v556, %v555
    %v587 = vpack.c.bf16 %v558, %v557
    %v588 = vpack.c.bf16 %v560, %v559
    %v589 = vpack.c.bf16 %v562, %v561
    %v590 = vpack.c.bf16 %v564, %v563
    %v591 = vpack.c.bf16 %v566, %v565
    %v592 = vpack.c.bf16 %v568, %v567
    %v609 = vunpack.c.l.b16 %v569
    %v610 = vunpack.c.l.b16 %v570
    %v611 = vunpack.c.l.b16 %v571
    %v612 = vunpack.c.l.b16 %v572
    %v613 = vunpack.c.l.b16 %v573
    %v614 = vunpack.c.l.b16 %v574
    %v615 = vunpack.c.l.b16 %v575
    %v616 = vunpack.c.l.b16 %v576
    %v617 = vunpack.c.l.b16 %v577
    %v618 = vunpack.c.l.b16 %v578
    %v619 = vunpack.c.l.b16 %v579
    %v620 = vunpack.c.l.b16 %v580
    %v621 = vunpack.c.l.b16 %v581
    %v622 = vunpack.c.l.b16 %v582
    %v623 = vunpack.c.l.b16 %v583
    %v624 = vunpack.c.l.b16 %v584
    %v625 = vpack.c.b16 %v610, %v609
    %v626 = vpack.c.b16 %v612, %v611
    %v627 = vpack.c.b16 %v614, %v613
    %v628 = vpack.c.b16 %v616, %v615
    %v629 = vpack.c.b16 %v618, %v617
    %v630 = vpack.c.b16 %v620, %v619
    %v631 = vpack.c.b16 %v622, %v621
    %v632 = vpack.c.b16 %v624, %v623
    %641 = vmatprep.subr.bf16.mxu0 0
    %642 = vmatpush1.bf16.msra.mxu0 %v592
    %643 = vmatprep.subr.bf16.mxu0 0
    %644 = vmatpush1.bf16.msra.mxu0 %v591
    %645 = vmatprep.subr.bf16.mxu0 0
    %646 = vmatpush1.bf16.msra.mxu0 %v590
    %647 = vmatprep.subr.bf16.mxu0 0
    %648 = vmatpush1.bf16.msra.mxu0 %v589
    %649 = vmatprep.subr.bf16.mxu0 0
    %650 = vmatpush1.bf16.msra.mxu0 %v588
    %651 = vmatprep.subr.bf16.mxu0 0
    %652 = vmatpush1.bf16.msra.mxu0 %v587
    %653 = vmatprep.subr.bf16.mxu0 0
    %654 = vmatpush1.bf16.msra.mxu0 %v586
    %655 = vmatprep.subr.bf16.mxu0 0
    %656 = vmatpush1.bf16.msra.mxu0 %v585
    %657 = vmatprep.subr.bf16.mxu0 0
    %658 = vmatpush2.bf16.msra.mxu0 0
    %659 = vmatprep.subr.bf16.mxu0 0
    %660 = vmatpush2.bf16.msra.mxu0 0
    %661 = vmatprep.subr.bf16.mxu0 0
    %662 = vmatpush2.bf16.msra.mxu0 0
    %663 = vmatprep.subr.bf16.mxu0 0
    %664 = vmatpush2.bf16.msra.mxu0 0
    %665 = vmatprep.subr.bf16.mxu0 0
    %666 = vmatpush2.bf16.msra.mxu0 0
    %667 = vmatprep.subr.bf16.mxu0 0
    %668 = vmatpush2.bf16.msra.mxu0 0
    %669 = vmatprep.subr.bf16.mxu0 0
    %670 = vmatpush2.bf16.msra.mxu0 0
    %671 = vmatprep.subr.bf16.mxu0 0
    %672 = vmatpush2.bf16.msra.mxu0 0
    %673 = vmatprep.mubr.bf16.mxu0 0
    %674 = vmatmul.mubr.bf16.gmra.mxu0 %v625
    %v675 = vpop.f32.mrf.mxu0
    %v676 = vadd.f32 0.0, %v675
    %v677 = vpop.f32.mrf.mxu0
    %v678 = vpop.f32.mrf.mxu0
    %v679 = vadd.f32 0.0, %v678
    %v680 = vpop.f32.mrf.mxu0
    %681 = vmatprep.mubr.bf16.mxu0 0
    %682 = vmatmul.mubr.bf16.gmra.mxu0 %v626
    %v683 = vpop.f32.mrf.mxu0
    %v684 = vadd.f32 0.0, %v683
    %v685 = vpop.f32.mrf.mxu0
    %v686 = vpop.f32.mrf.mxu0
    %v687 = vadd.f32 0.0, %v686
    %v688 = vpop.f32.mrf.mxu0
    %689 = vmatprep.mubr.bf16.mxu0 0
    %690 = vmatmul.mubr.bf16.gmra.mxu0 %v627
    %v691 = vpop.f32.mrf.mxu0
    %v692 = vadd.f32 0.0, %v691
    %v693 = vpop.f32.mrf.mxu0
    %v694 = vpop.f32.mrf.mxu0
    %v695 = vadd.f32 0.0, %v694
    %v696 = vpop.f32.mrf.mxu0
    %697 = vmatprep.mubr.bf16.mxu0 0
    %698 = vmatmul.mubr.bf16.gmra.mxu0 %v628
    %v699 = vpop.f32.mrf.mxu0
    %v700 = vadd.f32 0.0, %v699
    %v701 = vpop.f32.mrf.mxu0
    %v702 = vpop.f32.mrf.mxu0
    %v703 = vadd.f32 0.0, %v702
    %v704 = vpop.f32.mrf.mxu0
    %705 = vmatprep.mubr.bf16.mxu0 0
    %706 = vmatmul.mubr.bf16.gmra.mxu0 %v629
    %v707 = vpop.f32.mrf.mxu0
    %v708 = vadd.f32 0.0, %v707
    %v709 = vpop.f32.mrf.mxu0
    %v710 = vpop.f32.mrf.mxu0
    %v711 = vadd.f32 0.0, %v710
    %v712 = vpop.f32.mrf.mxu0
    %713 = vmatprep.mubr.bf16.mxu0 0
    %714 = vmatmul.mubr.bf16.gmra.mxu0 %v630
    %v715 = vpop.f32.mrf.mxu0
    %v716 = vadd.f32 0.0, %v715
    %v717 = vpop.f32.mrf.mxu0
    %v718 = vpop.f32.mrf.mxu0
    %v719 = vadd.f32 0.0, %v718
    %v720 = vpop.f32.mrf.mxu0
    %721 = vmatprep.mubr.bf16.mxu0 0
    %722 = vmatmul.mubr.bf16.gmra.mxu0 %v631
    %v723 = vpop.f32.mrf.mxu0
    %v724 = vadd.f32 0.0, %v723
    %v725 = vpop.f32.mrf.mxu0
    %v726 = vpop.f32.mrf.mxu0
    %v727 = vadd.f32 0.0, %v726
    %v728 = vpop.f32.mrf.mxu0
    %729 = vmatprep.mubr.bf16.mxu0 0
    %730 = vmatmul.mubr.bf16.gmra.mxu0 %v632
    %v731 = vpop.f32.mrf.mxu0
    %v732 = vadd.f32 0.0, %v731
    %v733 = vpop.f32.mrf.mxu0
    %v734 = vpop.f32.mrf.mxu0
    %v735 = vadd.f32 0.0, %v734
    %v736 = vpop.f32.mrf.mxu0
    %737 = vdwg.mxu0
    %v738 = vadd.f32 %v553, %v676
    %v739 = vadd.f32 %v554, %v679
    %v740 = vadd.f32 %v555, %v684
    %v741 = vadd.f32 %v556, %v687
    %v742 = vadd.f32 %v557, %v692
    %v743 = vadd.f32 %v558, %v695
    %v744 = vadd.f32 %v559, %v700
    %v745 = vadd.f32 %v560, %v703
    %v746 = vadd.f32 %v561, %v708
    %v747 = vadd.f32 %v562, %v711
    %v748 = vadd.f32 %v563, %v716
    %v749 = vadd.f32 %v564, %v719
    %v750 = vadd.f32 %v565, %v724
    %v751 = vadd.f32 %v566, %v727
    %v752 = vadd.f32 %v567, %v732
    %v753 = vadd.f32 %v568, %v735
    %v754 = vmax.f32 %v738, 0.0
    %v755 = vmax.f32 %v739, 0.0
    %v756 = vmax.f32 %v740, 0.0
    %v757 = vmax.f32 %v741, 0.0
    %v758 = vmax.f32 %v742, 0.0
    %v759 = vmax.f32 %v743, 0.0
    %v760 = vmax.f32 %v744, 0.0
    %v761 = vmax.f32 %v745, 0.0
    %v762 = vmax.f32 %v746, 0.0
    %v763 = vmax.f32 %v747, 0.0
    %v764 = vmax.f32 %v748, 0.0
    %v765 = vmax.f32 %v749, 0.0
    %v766 = vmax.f32 %v750, 0.0
    %v767 = vmax.f32 %v751, 0.0
    %v768 = vmax.f32 %v752, 0.0
    %v769 = vmax.f32 %v753, 0.0
    %v770 = vadd.f32 %v754, %v755
    %v771 = vadd.f32 %v770, %v756
    %v772 = vadd.f32 %v771, %v757
    %v773 = vadd.f32 %v772, %v758
    %v774 = vadd.f32 %v773, %v759
    %v775 = vadd.f32 %v774, %v760
    %v776 = vadd.f32 %v775, %v761
    %v777 = vadd.f32 %v776, %v762
    %v778 = vadd.f32 %v777, %v763
    %v779 = vadd.f32 %v778, %v764
    %v780 = vadd.f32 %v779, %v765
    %v781 = vadd.f32 %v780, %v766
    %v782 = vadd.f32 %v781, %v767
    %v783 = vadd.f32 %v782, %v768
    %v784 = vadd.f32 %v783, %v769
    %v785 = vrot.slane %v784, 4
    %v786 = vadd.f32 %v784, %v785
    %v787 = vrot.slane %v786, 2
    %v788 = vadd.f32 %v786, %v787
    %v789 = vrot.slane %v788, 1
    %v790 = vadd.f32 %v788, %v789
    %v791 = vmul.f32 %v790, 0.015625
    %v792 = vsub.f32 %v754, %v791
    %v793 = vsub.f32 %v755, %v791
    %v794 = vsub.f32 %v756, %v791
    %v795 = vsub.f32 %v757, %v791
    %v796 = vsub.f32 %v758, %v791
    %v797 = vsub.f32 %v759, %v791
    %v798 = vsub.f32 %v760, %v791
    %v799 = vsub.f32 %v761, %v791
    %v800 = vsub.f32 %v762, %v791
    %v801 = vsub.f32 %v763, %v791
    %v802 = vsub.f32 %v764, %v791
    %v803 = vsub.f32 %v765, %v791
    %v804 = vsub.f32 %v766, %v791
    %v805 = vsub.f32 %v767, %v791
    %v806 = vsub.f32 %v768, %v791
    %v807 = vsub.f32 %v769, %v791
    %v808 = vmul.f32 %v792, %v115
    %v809 = vmul.f32 %v793, %v116
    %v810 = vmul.f32 %v794, %v117
    %v811 = vmul.f32 %v795, %v118
    %v812 = vmul.f32 %v796, %v119
    %v813 = vmul.f32 %v797, %v120
    %v814 = vmul.f32 %v798, %v121
    %v815 = vmul.f32 %v799, %v122
    %v816 = vmul.f32 %v800, %v123
    %v817 = vmul.f32 %v801, %v124
    %v818 = vmul.f32 %v802, %v125
    %v819 = vmul.f32 %v803, %v126
    %v820 = vmul.f32 %v804, %v127
    %v821 = vmul.f32 %v805, %v128
    %v822 = vmul.f32 %v806, %v129
    %v823 = vmul.f32 %v807, %v130
    %v824 = vmul.f32 %v808, %v808
    %v825 = vmul.f32 %v809, %v809
    %v826 = vmul.f32 %v810, %v810
    %v827 = vmul.f32 %v811, %v811
    %v828 = vmul.f32 %v812, %v812
    %v829 = vmul.f32 %v813, %v813
    %v830 = vmul.f32 %v814, %v814
    %v831 = vmul.f32 %v815, %v815
    %v832 = vmul.f32 %v816, %v816
    %v833 = vmul.f32 %v817, %v817
    %v834 = vmul.f32 %v818, %v818
    %v835 = vmul.f32 %v819, %v819
    %v836 = vmul.f32 %v820, %v820
    %v837 = vmul.f32 %v821, %v821
    %v838 = vmul.f32 %v822, %v822
    %v839 = vmul.f32 %v823, %v823
    %v840 = vadd.f32 %v824, %v825
    %v841 = vadd.f32 %v840, %v826
    %v842 = vadd.f32 %v841, %v827
    %v843 = vadd.f32 %v842, %v828
    %v844 = vadd.f32 %v843, %v829
    %v845 = vadd.f32 %v844, %v830
    %v846 = vadd.f32 %v845, %v831
    %v847 = vadd.f32 %v846, %v832
    %v848 = vadd.f32 %v847, %v833
    %v849 = vadd.f32 %v848, %v834
    %v850 = vadd.f32 %v849, %v835
    %v851 = vadd.f32 %v850, %v836
    %v852 = vadd.f32 %v851, %v837
    %v853 = vadd.f32 %v852, %v838
    %v854 = vadd.f32 %v853, %v839
    %v855 = vrot.slane %v854, 4
    %v856 = vadd.f32 %v854, %v855
    %v857 = vrot.slane %v856, 2
    %v858 = vadd.f32 %v856, %v857
    %v859 = vrot.slane %v858, 1
    %v860 = vadd.f32 %v858, %v859
    %v861 = vmul.f32 %v860, 0.015625
    %s862 = scalar_lea.vmem %s2, 1
    %v863 = vld [vmem:[%s862] sm:$0x1]
    %v864 = vadd.f32 %v861, 1e-05
    %v865 = vrsqrt.pop %v864
    %v866 = vmul.f32 %v863, %v865
    %v868 = vlaneseq
    %v869 = vshrl.u32 %v868, 7
    %v870 = vsub.s32 0, %v869
    %v871 = vrot.slane %v866, %v870
    %v873 = vmul.f32 %v808, %v871
    %v874 = vmul.f32 %v809, %v871
    %v875 = vmul.f32 %v810, %v871
    %v876 = vmul.f32 %v811, %v871
    %v877 = vmul.f32 %v812, %v871
    %v878 = vmul.f32 %v813, %v871
    %v879 = vmul.f32 %v814, %v871
    %v880 = vmul.f32 %v815, %v871
    %v881 = vmul.f32 %v816, %v871
    %v882 = vmul.f32 %v817, %v871
    %v883 = vmul.f32 %v818, %v871
    %v884 = vmul.f32 %v819, %v871
    %v885 = vmul.f32 %v820, %v871
    %v886 = vmul.f32 %v821, %v871
    %v887 = vmul.f32 %v822, %v871
    %v888 = vmul.f32 %v823, %v871
    %s889 = scalar_lea.vmem %s3, 1
    %v890 = vld [vmem:[%s889] sm:$0x1]
    %v892 = vlaneseq
    %v893 = vshrl.u32 %v892, 7
    %v894 = vsub.s32 0, %v893
    %v895 = vrot.slane %v890, %v894
    %v897 = vadd.f32 %v873, %v895
    %v898 = vadd.f32 %v874, %v895
    %v899 = vadd.f32 %v875, %v895
    %v900 = vadd.f32 %v876, %v895
    %v901 = vadd.f32 %v877, %v895
    %v902 = vadd.f32 %v878, %v895
    %v903 = vadd.f32 %v879, %v895
    %v904 = vadd.f32 %v880, %v895
    %v905 = vadd.f32 %v881, %v895
    %v906 = vadd.f32 %v882, %v895
    %v907 = vadd.f32 %v883, %v895
    %v908 = vadd.f32 %v884, %v895
    %v909 = vadd.f32 %v885, %v895
    %v910 = vadd.f32 %v886, %v895
    %v911 = vadd.f32 %v887, %v895
    %v912 = vadd.f32 %v888, %v895
    %v913 = vmul.f32 %v897, %v115
    %v914 = vmul.f32 %v898, %v116
    %v915 = vmul.f32 %v899, %v117
    %v916 = vmul.f32 %v900, %v118
    %v917 = vmul.f32 %v901, %v119
    %v918 = vmul.f32 %v902, %v120
    %v919 = vmul.f32 %v903, %v121
    %v920 = vmul.f32 %v904, %v122
    %v921 = vmul.f32 %v905, %v123
    %v922 = vmul.f32 %v906, %v124
    %v923 = vmul.f32 %v907, %v125
    %v924 = vmul.f32 %v908, %v126
    %v925 = vmul.f32 %v909, %v127
    %v926 = vmul.f32 %v910, %v128
    %v927 = vmul.f32 %v911, %v129
    %v928 = vmul.f32 %v912, %v130
    %929 = vst [vmem:[#allocation2] sm:$0xff] %v913
    %930 = vst [vmem:[#allocation2 + $0x8] sm:$0xff] %v914
    %931 = vst [vmem:[#allocation2 + $0x10] sm:$0xff] %v915
    %932 = vst [vmem:[#allocation2 + $0x18] sm:$0xff] %v916
    %933 = vst [vmem:[#allocation2 + $0x20] sm:$0xff] %v917
    %934 = vst [vmem:[#allocation2 + $0x28] sm:$0xff] %v918
    %935 = vst [vmem:[#allocation2 + $0x30] sm:$0xff] %v919
    %936 = vst [vmem:[#allocation2 + $0x38] sm:$0xff] %v920
    %937 = vst [vmem:[#allocation2 + $0x40] sm:$0xff] %v921
    %938 = vst [vmem:[#allocation2 + $0x48] sm:$0xff] %v922
    %939 = vst [vmem:[#allocation2 + $0x50] sm:$0xff] %v923
    %940 = vst [vmem:[#allocation2 + $0x58] sm:$0xff] %v924
    %941 = vst [vmem:[#allocation2 + $0x60] sm:$0xff] %v925
    %942 = vst [vmem:[#allocation2 + $0x68] sm:$0xff] %v926
    %943 = vst [vmem:[#allocation2 + $0x70] sm:$0xff] %v927
    %944 = vst [vmem:[#allocation2 + $0x78] sm:$0xff] %v928
    %v945 = vld [vmem:[#allocation2] sm:$0xff]
    %v946 = vld [vmem:[#allocation2 + $0x8] sm:$0xff]
    %v947 = vld [vmem:[#allocation2 + $0x10] sm:$0xff]
    %v948 = vld [vmem:[#allocation2 + $0x18] sm:$0xff]
    %v949 = vld [vmem:[#allocation2 + $0x20] sm:$0xff]
    %v950 = vld [vmem:[#allocation2 + $0x28] sm:$0xff]
    %v951 = vld [vmem:[#allocation2 + $0x30] sm:$0xff]
    %v952 = vld [vmem:[#allocation2 + $0x38] sm:$0xff]
    %v953 = vld [vmem:[#allocation2 + $0x40] sm:$0xff]
    %v954 = vld [vmem:[#allocation2 + $0x48] sm:$0xff]
    %v955 = vld [vmem:[#allocation2 + $0x50] sm:$0xff]
    %v956 = vld [vmem:[#allocation2 + $0x58] sm:$0xff]
    %v957 = vld [vmem:[#allocation2 + $0x60] sm:$0xff]
    %v958 = vld [vmem:[#allocation2 + $0x68] sm:$0xff]
    %v959 = vld [vmem:[#allocation2 + $0x70] sm:$0xff]
    %v960 = vld [vmem:[#allocation2 + $0x78] sm:$0xff]
    %v961 = vpack.c.bf16 %v946, %v945
    %v962 = vpack.c.bf16 %v948, %v947
    %v963 = vpack.c.bf16 %v950, %v949
    %v964 = vpack.c.bf16 %v952, %v951
    %v965 = vpack.c.bf16 %v954, %v953
    %v966 = vpack.c.bf16 %v956, %v955
    %v967 = vpack.c.bf16 %v958, %v957
    %v968 = vpack.c.bf16 %v960, %v959
    %v969 = vld [vmem:[#allocation8] sm:$0xf]
    %v970 = vld [vmem:[#allocation8 + $0x4] sm:$0xf]
    %v971 = vld [vmem:[#allocation8 + $0x8] sm:$0xf]
    %v972 = vld [vmem:[#allocation8 + $0xc] sm:$0xf]
    %v973 = vld [vmem:[#allocation8 + $0x10] sm:$0xf]
    %v974 = vld [vmem:[#allocation8 + $0x14] sm:$0xf]
    %v975 = vld [vmem:[#allocation8 + $0x18] sm:$0xf]
    %v976 = vld [vmem:[#allocation8 + $0x1c] sm:$0xf]
    %v977 = vld [vmem:[#allocation8 + $0x20] sm:$0xf]
    %v978 = vld [vmem:[#allocation8 + $0x24] sm:$0xf]
    %v979 = vld [vmem:[#allocation8 + $0x28] sm:$0xf]
    %v980 = vld [vmem:[#allocation8 + $0x2c] sm:$0xf]
    %v981 = vld [vmem:[#allocation8 + $0x30] sm:$0xf]
    %v982 = vld [vmem:[#allocation8 + $0x34] sm:$0xf]
    %v983 = vld [vmem:[#allocation8 + $0x38] sm:$0xf]
    %v984 = vld [vmem:[#allocation8 + $0x3c] sm:$0xf]
    %v985 = vld [vmem:[%s5] sm:$0x1]
    %v987 = vlaneseq
    %v988 = vshrl.u32 %v987, 7
    %v989 = vsub.s32 0, %v988
    %v990 = vrot.slane %v985, %v989
    %v1008 = vunpack.c.l.b16 %v969
    %v1009 = vunpack.c.l.b16 %v970
    %v1010 = vunpack.c.l.b16 %v971
    %v1011 = vunpack.c.l.b16 %v972
    %v1012 = vunpack.c.l.b16 %v973
    %v1013 = vunpack.c.l.b16 %v974
    %v1014 = vunpack.c.l.b16 %v975
    %v1015 = vunpack.c.l.b16 %v976
    %v1016 = vunpack.c.l.b16 %v977
    %v1017 = vunpack.c.l.b16 %v978
    %v1018 = vunpack.c.l.b16 %v979
    %v1019 = vunpack.c.l.b16 %v980
    %v1020 = vunpack.c.l.b16 %v981
    %v1021 = vunpack.c.l.b16 %v982
    %v1022 = vunpack.c.l.b16 %v983
    %v1023 = vunpack.c.l.b16 %v984
    %v1024 = vpack.c.b16 %v1009, %v1008
    %v1025 = vpack.c.b16 %v1011, %v1010
    %v1026 = vpack.c.b16 %v1013, %v1012
    %v1027 = vpack.c.b16 %v1015, %v1014
    %v1028 = vpack.c.b16 %v1017, %v1016
    %v1029 = vpack.c.b16 %v1019, %v1018
    %v1030 = vpack.c.b16 %v1021, %v1020
    %v1031 = vpack.c.b16 %v1023, %v1022
    %1040 = vmatprep.subr.bf16.mxu0 0
    %1041 = vmatpush1.bf16.msra.mxu0 %v1031
    %1042 = vmatprep.subr.bf16.mxu0 0
    %1043 = vmatpush1.bf16.msra.mxu0 %v1030
    %1044 = vmatprep.subr.bf16.mxu0 0
    %1045 = vmatpush1.bf16.msra.mxu0 %v1029
    %1046 = vmatprep.subr.bf16.mxu0 0
    %1047 = vmatpush1.bf16.msra.mxu0 %v1028
    %1048 = vmatprep.subr.bf16.mxu0 0
    %1049 = vmatpush1.bf16.msra.mxu0 %v1027
    %1050 = vmatprep.subr.bf16.mxu0 0
    %1051 = vmatpush1.bf16.msra.mxu0 %v1026
    %1052 = vmatprep.subr.bf16.mxu0 0
    %1053 = vmatpush1.bf16.msra.mxu0 %v1025
    %1054 = vmatprep.subr.bf16.mxu0 0
    %1055 = vmatpush1.bf16.msra.mxu0 %v1024
    %1056 = vmatprep.subr.bf16.mxu0 0
    %1057 = vmatpush2.bf16.msra.mxu0 0
    %1058 = vmatprep.subr.bf16.mxu0 0
    %1059 = vmatpush2.bf16.msra.mxu0 0
    %1060 = vmatprep.subr.bf16.mxu0 0
    %1061 = vmatpush2.bf16.msra.mxu0 0
    %1062 = vmatprep.subr.bf16.mxu0 0
    %1063 = vmatpush2.bf16.msra.mxu0 0
    %1064 = vmatprep.subr.bf16.mxu0 0
    %1065 = vmatpush2.bf16.msra.mxu0 0
    %1066 = vmatprep.subr.bf16.mxu0 0
    %1067 = vmatpush2.bf16.msra.mxu0 0
    %1068 = vmatprep.subr.bf16.mxu0 0
    %1069 = vmatpush2.bf16.msra.mxu0 0
    %1070 = vmatprep.subr.bf16.mxu0 0
    %1071 = vmatpush2.bf16.msra.mxu0 0
    %1072 = vmatprep.mubr.bf16.mxu0 0
    %1073 = vmatmul.mubr.bf16.gmra.mxu0 %v961
    %v1074 = vpop.f32.mrf.mxu0
    %v1075 = vadd.f32 %v990, %v1074
    %v1076 = vpop.f32.mrf.mxu0
    %v1077 = vpop.f32.mrf.mxu0
    %v1078 = vadd.f32 %v990, %v1077
    %v1079 = vpop.f32.mrf.mxu0
    %1080 = vmatprep.mubr.bf16.mxu0 0
    %1081 = vmatmul.mubr.bf16.gmra.mxu0 %v962
    %v1082 = vpop.f32.mrf.mxu0
    %v1083 = vadd.f32 %v990, %v1082
    %v1084 = vpop.f32.mrf.mxu0
    %v1085 = vpop.f32.mrf.mxu0
    %v1086 = vadd.f32 %v990, %v1085
    %v1087 = vpop.f32.mrf.mxu0
    %1088 = vmatprep.mubr.bf16.mxu0 0
    %1089 = vmatmul.mubr.bf16.gmra.mxu0 %v963
    %v1090 = vpop.f32.mrf.mxu0
    %v1091 = vadd.f32 %v990, %v1090
    %v1092 = vpop.f32.mrf.mxu0
    %v1093 = vpop.f32.mrf.mxu0
    %v1094 = vadd.f32 %v990, %v1093
    %v1095 = vpop.f32.mrf.mxu0
    %1096 = vmatprep.mubr.bf16.mxu0 0
    %1097 = vmatmul.mubr.bf16.gmra.mxu0 %v964
    %v1098 = vpop.f32.mrf.mxu0
    %v1099 = vadd.f32 %v990, %v1098
    %v1100 = vpop.f32.mrf.mxu0
    %v1101 = vpop.f32.mrf.mxu0
    %v1102 = vadd.f32 %v990, %v1101
    %v1103 = vpop.f32.mrf.mxu0
    %1104 = vmatprep.mubr.bf16.mxu0 0
    %1105 = vmatmul.mubr.bf16.gmra.mxu0 %v965
    %v1106 = vpop.f32.mrf.mxu0
    %v1107 = vadd.f32 %v990, %v1106
    %v1108 = vpop.f32.mrf.mxu0
    %v1109 = vpop.f32.mrf.mxu0
    %v1110 = vadd.f32 %v990, %v1109
    %v1111 = vpop.f32.mrf.mxu0
    %1112 = vmatprep.mubr.bf16.mxu0 0
    %1113 = vmatmul.mubr.bf16.gmra.mxu0 %v966
    %v1114 = vpop.f32.mrf.mxu0
    %v1115 = vadd.f32 %v990, %v1114
    %v1116 = vpop.f32.mrf.mxu0
    %v1117 = vpop.f32.mrf.mxu0
    %v1118 = vadd.f32 %v990, %v1117
    %v1119 = vpop.f32.mrf.mxu0
    %1120 = vmatprep.mubr.bf16.mxu0 0
    %1121 = vmatmul.mubr.bf16.gmra.mxu0 %v967
    %v1122 = vpop.f32.mrf.mxu0
    %v1123 = vadd.f32 %v990, %v1122
    %v1124 = vpop.f32.mrf.mxu0
    %v1125 = vpop.f32.mrf.mxu0
    %v1126 = vadd.f32 %v990, %v1125
    %v1127 = vpop.f32.mrf.mxu0
    %1128 = vmatprep.mubr.bf16.mxu0 0
    %1129 = vmatmul.mubr.bf16.gmra.mxu0 %v968
    %v1130 = vpop.f32.mrf.mxu0
    %v1131 = vadd.f32 %v990, %v1130
    %v1132 = vpop.f32.mrf.mxu0
    %v1133 = vpop.f32.mrf.mxu0
    %v1134 = vadd.f32 %v990, %v1133
    %v1135 = vpop.f32.mrf.mxu0
    %1136 = vdwg.mxu0
    %1137 = vst [vmem:[#allocation9] sm:$0xff] %v1075
    %1138 = vst [vmem:[#allocation9 + $0x8] sm:$0xff] %v1078
    %1139 = vst [vmem:[#allocation9 + $0x10] sm:$0xff] %v1083
    %1140 = vst [vmem:[#allocation9 + $0x18] sm:$0xff] %v1086
    %1141 = vst [vmem:[#allocation9 + $0x20] sm:$0xff] %v1091
    %1142 = vst [vmem:[#allocation9 + $0x28] sm:$0xff] %v1094
    %1143 = vst [vmem:[#allocation9 + $0x30] sm:$0xff] %v1099
    %1144 = vst [vmem:[#allocation9 + $0x38] sm:$0xff] %v1102
    %1145 = vst [vmem:[#allocation9 + $0x40] sm:$0xff] %v1107
    %1146 = vst [vmem:[#allocation9 + $0x48] sm:$0xff] %v1110
    %1147 = vst [vmem:[#allocation9 + $0x50] sm:$0xff] %v1115
    %1148 = vst [vmem:[#allocation9 + $0x58] sm:$0xff] %v1118
    %1149 = vst [vmem:[#allocation9 + $0x60] sm:$0xff] %v1123
    %1150 = vst [vmem:[#allocation9 + $0x68] sm:$0xff] %v1126
    %1151 = vst [vmem:[#allocation9 + $0x70] sm:$0xff] %v1131
    %1152 = vst [vmem:[#allocation9 + $0x78] sm:$0xff] %v1134
    // Predicated region
    $region38: #{tpu_custom_call.1} parent=1 // pred_check
      _
    $region39: #{tpu_custom_call.1} parent=1 // pred_check_branch
      %1154 = sbr.rel (0) target = $region41
    $region40: #{tpu_custom_call.1} parent=1 // pred_region
      %s1156 = ssub.s32 2048, 2048
      %1157 = vsyncadd [#allocation5], %s1156
      %s1158 = sshll.u32 [#allocation9], 4
      %s1159 = int_to_ptr.vmem [resolvable:$true] %s1158
      %1164 = dma.vmem_to_hbm [thread:$0]  %s1159, 2048, %s6, [#allocation5], 128, 128, 8
    $region41: #{tpu_custom_call.1} parent=1 // pred_fallthru
      _
    // Predicated region
    $region42: #{tpu_custom_call.1} parent=1 // pred_check
      _
    $region43: #{tpu_custom_call.1} parent=1 // pred_check_branch
      %1166 = sbr.rel (0) target = $region45
    $region44: #{tpu_custom_call.1} parent=1 // pred_region
      %1167 = dma.done [#allocation5], 2048
    $region45: #{tpu_custom_call.1} parent=1 // pred_fallthru
      _
    %1168 = vsyncpa [#allocation4], 1
    %1169 = vsyncpa [#allocation7], 1
    %1170 = vsyncpa [#allocation5], 1

</llo_original>
